<compile_context>
chip_gen: v5e
topology: v5e:2x2
jax: 0.10.0
libtpu: 0.0.40
codegen_flags: <defaults>
</compile_context>

<pallas_src>
import jax
import jax.numpy as jnp
from jax.experimental import pallas as pl
from jax.experimental.pallas import tpu as pltpu


def channel_attention_kernel(x_ref, w1_ref, w2_ref, o_ref):
    # x_ref block: (Bt, C, HW) -- C on sublanes, HW on lanes.
    bt = x_ref.shape[0]
    hw = x_ref.shape[2]
    inv_hw = 1.0 / hw

    # ---- Squeeze: per-channel mean & max over HW (lane-axis reductions). ----
    # Keep everything channel-major: results are (C, 1) columns, no transposes.
    avg_cols = []
    max_cols = []
    for b in range(bt):                       # static unroll, Bt is small
        xb = x_ref[b]                         # (C, HW)
        avg_cols.append(jnp.sum(xb, axis=1, keepdims=True) * inv_hw)  # (C, 1)
        max_cols.append(jnp.max(xb, axis=1, keepdims=True))           # (C, 1)
    feats = jnp.concatenate(avg_cols + max_cols, axis=1)              # (C, 2*Bt)

    # ---- Shared MLP (fc1 -> relu -> fc2), channel-major, one MXU pass for ----
    # ---- all Bt batch elements and both (avg, max) branches.             ----
    h = jnp.dot(w1_ref[...], feats, preferred_element_type=jnp.float32)  # (C//r, 2*Bt)
    h = jnp.maximum(h, 0.0)
    o = jnp.dot(w2_ref[...], h, preferred_element_type=jnp.float32)      # (C, 2*Bt)

    # sigmoid(avg_branch + max_branch) -> per-channel attention per batch elem.
    att = jax.nn.sigmoid(o[:, :bt] + o[:, bt:])                          # (C, Bt)

    # ---- Excite: rescale channels.  (C,1) broadcasts over HW lanes. ----
    for b in range(bt):
        o_ref[b] = x_ref[b] * att[:, b:b + 1]


def _pick_batch_tile(b, per_batch_block_bytes, block_budget_bytes, target_steps=8):
    """Largest divisor of b whose 2x-in + 2x-out double buffers fit the budget,
    while keeping ~target_steps grid steps for pipeline overlap / megacore."""
    max_fit = max(1, block_budget_bytes // (4 * per_batch_block_bytes))
    want = max(1, b // target_steps)
    bt = 1
    for d in range(1, b + 1):
        if b % d == 0 and d <= max_fit and d <= want:
            bt = d
    return bt


def channel_attention(x, w1, w2, *, block_budget_bytes=24 * 1024 * 1024):
    """x: (B, C, H, W) f32; w1: (C//r, C) = fc1.weight; w2: (C, C//r) = fc2.weight."""
    b, c, h, w = x.shape
    hw = h * w
    hidden = w1.shape[0]
    assert w1.shape == (hidden, c) and w2.shape == (c, hidden)

    x_flat = x.reshape(b, c, hw)
    itemsize = x_flat.dtype.itemsize

    per_batch_block = c * hw * itemsize
    bt = _pick_batch_tile(b, per_batch_block, block_budget_bytes)
    grid_b = b // bt
    # TODO(synk): for very large C*HW (single batch element over budget) add an
    # HW-chunk grid axis (two-phase: accumulate sum/max per channel, then rescale).

    # Explicit VMEM limit: 2x(in) + 2x(out) pipeline buffers + tiny weights,
    # with headroom, kept well under v7x's 64 MiB physical VMEM.
    pipeline_bytes = 4 * bt * per_batch_block
    weight_bytes = 4 * hidden * c * itemsize           # 2 weights, double-buffered
    needed = pipeline_bytes + weight_bytes + (2 << 20)  # ~2 MiB slack
    vmem_limit = int(min(max(needed, 32 * 1024 * 1024), 48 * 1024 * 1024))

    out_flat = pl.pallas_call(
        channel_attention_kernel,
        out_shape=jax.ShapeDtypeStruct((b, c, hw), x.dtype),
        grid_spec=pltpu.PrefetchScalarGridSpec(
            num_scalar_prefetch=0,
            grid=(grid_b,),
            in_specs=[
                pl.BlockSpec((bt, c, hw), lambda i: (i, 0, 0)),
                pl.BlockSpec((hidden, c), lambda i: (0, 0)),
                pl.BlockSpec((c, hidden), lambda i: (0, 0)),
            ],
            out_specs=pl.BlockSpec((bt, c, hw), lambda i: (i, 0, 0)),
        ),
        compiler_params=pltpu.CompilerParams(
            dimension_semantics=("parallel",),
            vmem_limit_bytes=vmem_limit,
        ),
        # Output is a channel-scaled copy of x; each input block is fully read
        # before its output block is written -> in-place alias is safe.
        input_output_aliases={0: 0},
    )(x_flat, w1, w2)

    return out_flat.reshape(b, c, h, w)


def channel_attention_ref(x, w1, w2):
    """Pure-JAX reference mirroring the PyTorch forward (nn.Linear weights)."""
    avg = x.mean(axis=(2, 3))                       # (B, C)
    mx = x.max(axis=(2, 3))                         # (B, C)

    def mlp(v):
        return jnp.maximum(v @ w1.T, 0.0) @ w2.T    # fc2(relu(fc1(v)))

    att = jax.nn.sigmoid(mlp(avg) + mlp(mx))[:, :, None, None]
    return x * att


if __name__ == "__main__":
    B, C, H, W = 2, 32, 16, 16
    reduction = 16
    hidden = C // reduction                         # = 2

    key = jax.random.PRNGKey(0)
    kx, k1, k2 = jax.random.split(key, 3)

    x = jax.random.normal(kx, (B, C, H, W), dtype=jnp.float32)
    # Weights in native nn.Linear layout: fc1.weight (hidden, C), fc2.weight (C, hidden).
    w1 = jax.random.normal(k1, (hidden, C), dtype=jnp.float32) * 0.1
    w2 = jax.random.normal(k2, (C, hidden), dtype=jnp.float32) * 0.1

    out = channel_attention(x, w1, w2)
    out = jax.block_until_ready(out)

    ref = channel_attention_ref(x, w1, w2)
    assert out.shape == (B, C, H, W)
    assert jnp.allclose(out, ref, atol=1e-5, rtol=1e-5)

    print("KERNEL_OK")
</pallas_src>

<mosaic_0001>
module attributes {stable_mosaic.version = 11 : i64} {
  func.func @channel_attention_kernel(%arg0: i32, %arg1: memref<1x32x256xf32, #tpu.memory_space<vmem>>, %arg2: memref<2x32xf32, #tpu.memory_space<vmem>>, %arg3: memref<32x2xf32, #tpu.memory_space<vmem>>, %arg4: memref<1x32x256xf32, #tpu.memory_space<vmem>>) attributes {dimension_semantics = [#tpu.dimension_semantics<parallel>], iteration_bounds = array<i64: 2>, scalar_prefetch = 0 : i64, scratch_operands = 0 : i64, tpu.core_type = #tpu.core_type<tc>, window_params = [{transform_indices = @transform_0, window_bounds = array<i64: 1, 32, 256>}, {pipeline_mode = #tpu.pipeline_mode<synchronous>, transform_indices = @transform_1, window_bounds = array<i64: 2, 32>}, {pipeline_mode = #tpu.pipeline_mode<synchronous>, transform_indices = @transform_2, window_bounds = array<i64: 32, 2>}, {transform_indices = @transform_3, window_bounds = array<i64: 1, 32, 256>}]} {
    %c0 = arith.constant 0 : index
    %c0_0 = arith.constant 0 : index
    %c0_1 = arith.constant 0 : index
    %0 = vector.load %arg1[%c0, %c0_0, %c0_1] : memref<1x32x256xf32, #tpu.memory_space<vmem>>, vector<1x32x256xf32>
    %1 = vector.shape_cast %0 : vector<1x32x256xf32> to vector<32x256xf32>
    %cst = arith.constant dense<0.000000e+00> : vector<32xf32>
    %2 = vector.multi_reduction <add>, %1, %cst [1] : vector<32x256xf32> to vector<32xf32>
    %3 = vector.shape_cast %2 : vector<32xf32> to vector<32x1xf32>
    %cst_2 = arith.constant 3.906250e-03 : f32
    %4 = vector.broadcast %cst_2 : f32 to vector<32x1xf32>
    %5 = arith.mulf %3, %4 : vector<32x1xf32>
    %cst_3 = arith.constant dense<0xFF800000> : vector<32xf32>
    %6 = vector.multi_reduction <maximumf>, %1, %cst_3 [1] : vector<32x256xf32> to vector<32xf32>
    %7 = vector.shape_cast %6 : vector<32xf32> to vector<32x1xf32>
    %8 = tpu.concatenate %5, %7 in 1 : vector<32x1xf32>, vector<32x1xf32> -> vector<32x2xf32>
    %c0_4 = arith.constant 0 : index
    %c0_5 = arith.constant 0 : index
    %9 = vector.load %arg2[%c0_4, %c0_5] : memref<2x32xf32, #tpu.memory_space<vmem>>, vector<2x32xf32>
    %cst_6 = arith.constant dense<0.000000e+00> : vector<2x2xf32>
    %10 = tpu.matmul %9, %8, %cst_6 {dimension_numbers = #tpu.dot_dimension_numbers<[1], [0], [0], [1], [0, 0, 1, 1], [], []>} : vector<2x32xf32>, vector<32x2xf32>, vector<2x2xf32> -> vector<2x2xf32>
    %cst_7 = arith.constant 0.000000e+00 : f32
    %11 = vector.broadcast %cst_7 : f32 to vector<2x2xf32>
    %12 = arith.maximumf %10, %11 : vector<2x2xf32>
    %c0_8 = arith.constant 0 : index
    %c0_9 = arith.constant 0 : index
    %13 = vector.load %arg3[%c0_8, %c0_9] : memref<32x2xf32, #tpu.memory_space<vmem>>, vector<32x2xf32>
    %cst_10 = arith.constant dense<0.000000e+00> : vector<32x2xf32>
    %14 = tpu.matmul %13, %12, %cst_10 {dimension_numbers = #tpu.dot_dimension_numbers<[1], [0], [0], [1], [0, 0, 1, 1], [], []>} : vector<32x2xf32>, vector<2x2xf32>, vector<32x2xf32> -> vector<32x2xf32>
    %15 = vector.extract_strided_slice %14 {offsets = [0, 0], sizes = [32, 1], strides = [1, 1]} : vector<32x2xf32> to vector<32x1xf32>
    %16 = vector.extract_strided_slice %14 {offsets = [0, 1], sizes = [32, 1], strides = [1, 1]} : vector<32x2xf32> to vector<32x1xf32>
    %17 = arith.addf %15, %16 : vector<32x1xf32>
    %18 = arith.negf %17 : vector<32x1xf32>
    %19 = math.exp %18 : vector<32x1xf32>
    %cst_11 = arith.constant 1.000000e+00 : f32
    %20 = vector.broadcast %cst_11 : f32 to vector<32x1xf32>
    %21 = arith.addf %20, %19 : vector<32x1xf32>
    %22 = arith.divf %20, %21 : vector<32x1xf32>
    %c0_12 = arith.constant 0 : index
    %c0_13 = arith.constant 0 : index
    %c0_14 = arith.constant 0 : index
    %23 = vector.load %arg1[%c0_12, %c0_13, %c0_14] : memref<1x32x256xf32, #tpu.memory_space<vmem>>, vector<1x32x256xf32>
    %24 = vector.shape_cast %23 : vector<1x32x256xf32> to vector<32x256xf32>
    %25 = vector.broadcast %22 : vector<32x1xf32> to vector<32x256xf32>
    %26 = arith.mulf %24, %25 : vector<32x256xf32>
    %c0_15 = arith.constant 0 : index
    %c0_16 = arith.constant 0 : index
    %c0_17 = arith.constant 0 : index
    %27 = vector.load %arg4[%c0_15, %c0_16, %c0_17] : memref<1x32x256xf32, #tpu.memory_space<vmem>>, vector<1x32x256xf32>
    %28 = vector.shape_cast %27 : vector<1x32x256xf32> to vector<32x256xf32>
    %29 = vector.shape_cast %26 : vector<32x256xf32> to vector<1x32x256xf32>
    tpu.vector_store %arg4[%c0_15, %c0_16, %c0_17], %29 {strides = array<i32>} : memref<1x32x256xf32, #tpu.memory_space<vmem>>, vector<1x32x256xf32>,
    return
  }
  func.func @transform_0(%arg0: i32) -> (i32, i32, i32) {
    %c0_i32 = arith.constant 0 : i32
    %c0_i32_0 = arith.constant 0 : i32
    %c0_i32_1 = arith.constant 0 : i32
    return %arg0, %c0_i32, %c0_i32_0 : i32, i32, i32
  }
  func.func @transform_1(%arg0: i32) -> (i32, i32) {
    %c0_i32 = arith.constant 0 : i32
    %c0_i32_0 = arith.constant 0 : i32
    %c0_i32_1 = arith.constant 0 : i32
    return %c0_i32, %c0_i32_0 : i32, i32
  }
  func.func @transform_2(%arg0: i32) -> (i32, i32) {
    %c0_i32 = arith.constant 0 : i32
    %c0_i32_0 = arith.constant 0 : i32
    %c0_i32_1 = arith.constant 0 : i32
    return %c0_i32, %c0_i32_0 : i32, i32
  }
  func.func @transform_3(%arg0: i32) -> (i32, i32, i32) {
    %c0_i32 = arith.constant 0 : i32
    %c0_i32_0 = arith.constant 0 : i32
    %c0_i32_1 = arith.constant 0 : i32
    return %arg0, %c0_i32, %c0_i32_0 : i32, i32, i32
  }
}

</mosaic_0001>

<llo_original>
// kernel: tpu_custom_call.1
$region0: #{tpu_custom_call.1}
  #allocation0 [shape = 'u32[]', space=smem, size = 0x4, offset = 0x4, fixed_abs, tag = 'smem constant byte address 0x4 - core index']
  #allocation1 [shape = 'u32[72,128]{1,0:T(1,128)}', space=vmem, size = 0x9000, scoped, tag = 'internal scratch']
  %s0 = inlined_call_operand.hbm [shape: f32[2,32,256], index: 0, kind: input, shape index: {}, may-alias: {0,3}]
  %s1 = inlined_call_operand.vmem [shape: f32[2,32], index: 1, kind: input, shape index: {}]
  %s2 = inlined_call_operand.vmem [shape: f32[32,2], index: 2, kind: input, shape index: {}]
  %s3 = inlined_call_operand.hbm [shape: f32[2,32,256], index: 3, kind: output, shape index: {}, may-alias: {0,3}]
  %s4 = sld [smem:[#allocation0]]
  $region49: #{tpu_custom_call.1} parent=0
    _
  %s6 = ssub.s32 1, %s4
  %s7 = scalar_select 0, %s6, %s4
  $region1: #{tpu_custom_call.1} parent=0
    #allocation2 [shape = 'u8[65536]{0}', space=vmem, size = 0x10000, scoped, tag = 'input window, operand 0']
    #allocation3 [shape = 's32[2]{0}', space=sflag, size = 0x8, scoped, tag = 'scoped memory for tpu_custom_call.1']
    #allocation4 [shape = 's32[2]{0}', space=sflag, size = 0x8, scoped, tag = 'scoped memory for tpu_custom_call.1']
    #allocation5 [shape = 'u8[65536]{0}', space=vmem, size = 0x10000, scoped, tag = 'output window, operand 0']
    %8 = vsyncpa [#allocation3], 0
    %s9 = scalar_lea.sflag [#allocation3], 1
    %10 = vsyncpa %s9, 0
    %11 = vsyncpa [#allocation4], 0
    %s12 = scalar_lea.sflag [#allocation4], 1
    %13 = vsyncpa %s12, 0
    loop: start=0, step=1, limit=4
    $region2: #{tpu_custom_call.1} parent=1 // loop_pre_header
      _
    $region3: #{tpu_custom_call.1} parent=1 // loop_header
      %s15 = sphi 0, %s19
      %p16 = scmp.ge.s32.totalorder %s15, 4
      %s25 = sphi 0, %s27
      %s28 = sphi 0, %s25
      %s29 = sphi 0, %s28
      %s45 = sphi 0, %s29
      %s49 = sphi 0, %s49
      %s51 = sphi 0, %s49
      %s52 = sphi 0, %s51
      %s66 = sphi 0, %s52
      %s70 = sphi 0, %s70
      %s72 = sphi 0, %s70
      %s73 = sphi 0, %s72
      %s87 = sphi 0, %s73
      %s93 = sphi 0, %s95
      %s96 = sphi 0, %s93
      %s97 = sphi 0, %s96
      %s113 = sphi 0, %s97
    $region4: #{tpu_custom_call.1} parent=1 // loop_header_branch
      %18 = sbr.rel (%p16) target = $region8
    $region5: #{tpu_custom_call.1} parent=1 // loop_body
      %s20 = ssub.s32 %s15, 1
      %s21 = ssub.s32 %s15, 2
      %s22 = sadd.s32 %s15, 1
      %s23 = ssub.s32 %s15, %s22
      %p24 = scmp.eq.s32.totalorder %s23, 0
      %s26 = sadd.s32 %s25, 1
      %s27 = scalar_select %p24, %s25, %s26
      %p30 = pneg %p24
      %p31 = scmp.eq.s32.totalorder %s15, 1
      %p32 = por %p30, %p31
      %p33 = scmp.ne.s32.totalorder %s25, %s28
      %p34 = scmp.eq.s32.totalorder %s15, 0
      %p35 = por %p33, %p34
      %p36 = scmp.ne.s32.totalorder %s25, %s28
      %p37 = scmp.eq.s32.totalorder %s20, 1
      %p38 = por %p36, %p37
      %p39 = scmp.ne.s32.totalorder %s28, %s29
      %p40 = scmp.eq.s32.totalorder %s20, 0
      %p41 = por %p39, %p40
      %p42 = scmp.ne.s32.totalorder %s28, %s29
      %p43 = scmp.eq.s32.totalorder %s21, 1
      %p44 = por %p42, %p43
      %p46 = scmp.ne.s32.totalorder %s29, %s45
      %p47 = scmp.eq.s32.totalorder %s21, 0
      %p48 = por %p46, %p47
      %s50 = sadd.s32 %s49, 1
      %p53 = scmp.eq.s32.totalorder %s15, 1
      %p54 = scmp.ne.s32.totalorder %s49, %s51
      %p55 = scmp.eq.s32.totalorder %s15, 0
      %p56 = por %p54, %p55
      %p57 = scmp.ne.s32.totalorder %s49, %s51
      %p58 = scmp.eq.s32.totalorder %s20, 1
      %p59 = por %p57, %p58
      %p60 = scmp.ne.s32.totalorder %s51, %s52
      %p61 = scmp.eq.s32.totalorder %s20, 0
      %p62 = por %p60, %p61
      %p63 = scmp.ne.s32.totalorder %s51, %s52
      %p64 = scmp.eq.s32.totalorder %s21, 1
      %p65 = por %p63, %p64
      %p67 = scmp.ne.s32.totalorder %s52, %s66
      %p68 = scmp.eq.s32.totalorder %s21, 0
      %p69 = por %p67, %p68
      %s71 = sadd.s32 %s70, 1
      %p74 = scmp.eq.s32.totalorder %s15, 1
      %p75 = scmp.ne.s32.totalorder %s70, %s72
      %p76 = scmp.eq.s32.totalorder %s15, 0
      %p77 = por %p75, %p76
      %p78 = scmp.ne.s32.totalorder %s70, %s72
      %p79 = scmp.eq.s32.totalorder %s20, 1
      %p80 = por %p78, %p79
      %p81 = scmp.ne.s32.totalorder %s72, %s73
      %p82 = scmp.eq.s32.totalorder %s20, 0
      %p83 = por %p81, %p82
      %p84 = scmp.ne.s32.totalorder %s72, %s73
      %p85 = scmp.eq.s32.totalorder %s21, 1
      %p86 = por %p84, %p85
      %p88 = scmp.ne.s32.totalorder %s73, %s87
      %p89 = scmp.eq.s32.totalorder %s21, 0
      %p90 = por %p88, %p89
      %s91 = ssub.s32 %s15, %s22
      %p92 = scmp.eq.s32.totalorder %s91, 0
      %s94 = sadd.s32 %s93, 1
      %s95 = scalar_select %p92, %s93, %s94
      %p98 = pneg %p92
      %p99 = scmp.eq.s32.totalorder %s15, 1
      %p100 = por %p98, %p99
      %p101 = scmp.ne.s32.totalorder %s93, %s96
      %p102 = scmp.eq.s32.totalorder %s15, 0
      %p103 = por %p101, %p102
      %p104 = scmp.ne.s32.totalorder %s93, %s96
      %p105 = scmp.eq.s32.totalorder %s20, 1
      %p106 = por %p104, %p105
      %p107 = scmp.ne.s32.totalorder %s96, %s97
      %p108 = scmp.eq.s32.totalorder %s20, 0
      %p109 = por %p107, %p108
      %p110 = scmp.ne.s32.totalorder %s96, %s97
      %p111 = scmp.eq.s32.totalorder %s21, 1
      %p112 = por %p110, %p111
      %p114 = scmp.ne.s32.totalorder %s97, %s113
      %p115 = scmp.eq.s32.totalorder %s21, 0
      %p116 = por %p114, %p115
      %p117 = scmp.le.s32.totalorder 1, %s15
      %p118 = scmp.lt.s32.totalorder %s15, 3
      %p119 = pnand %p117, %p118
      %p120 = pneg %p119
      // Predicated region
      $region9: #{tpu_custom_call.1} parent=5 // pred_check
        _
      $region10: #{tpu_custom_call.1} parent=5 // pred_check_branch
        %122 = sbr.rel (%p119) target = $region12
      $region11: #{tpu_custom_call.1} parent=5 // pred_region
        %s123 = ssub.s32 %s15, 1
        // Predicated region
        $region13: #{tpu_custom_call.1} parent=11 // pred_check
          %p124 = pneg %p62
        $region14: #{tpu_custom_call.1} parent=11 // pred_check_branch
          %126 = sbr.rel (%p124) target = $region16
        $region15: #{tpu_custom_call.1} parent=11 // pred_region
          _
        $region16: #{tpu_custom_call.1} parent=11 // pred_fallthru
          _
        // Predicated region
        $region17: #{tpu_custom_call.1} parent=11 // pred_check
          %p127 = pneg %p83
        $region18: #{tpu_custom_call.1} parent=11 // pred_check_branch
          %129 = sbr.rel (%p127) target = $region20
        $region19: #{tpu_custom_call.1} parent=11 // pred_region
          _
        $region20: #{tpu_custom_call.1} parent=11 // pred_fallthru
          _
      $region12: #{tpu_custom_call.1} parent=5 // pred_fallthru
        _
      %p130 = scmp.lt.s32.totalorder %s15, 2
      // Predicated region
      $region21: #{tpu_custom_call.1} parent=5 // pred_check
        %p131 = pneg %p130
      $region22: #{tpu_custom_call.1} parent=5 // pred_check_branch
        %133 = sbr.rel (%p131) target = $region24
      $region23: #{tpu_custom_call.1} parent=5 // pred_region
        // Predicated region
        $region25: #{tpu_custom_call.1} parent=23 // pred_check
          %p134 = pneg %p35
        $region26: #{tpu_custom_call.1} parent=23 // pred_check_branch
          %136 = sbr.rel (%p134) target = $region28
        $region27: #{tpu_custom_call.1} parent=23 // pred_region
          %s137 = sand.u32 %s25, 1
          %s138 = scalar_lea.sflag [#allocation3], %s137
          %s139 = sand.u32 %s25, 1
          %s140 = smul.addr %s139, 64
          %s141 = scalar_lea.vmem [#allocation2], %s140
          %143 = vsyncadd %s138, 0
          %s144 = smul.addr %s15, 8
          %s145 = smul.addr %s144, 8
          %s146 = scalar_lea.hbm %s0, %s145
          %s147 = sshll.u32 %s146, 4
          %s148 = int_to_ptr.hbm [resolvable:$true] %s147
          %s149 = sshll.u32 %s141, 4
          %s150 = int_to_ptr.vmem [resolvable:$true] %s149
          %155 = dma.hbm_to_vmem [thread:$0]  %s148, 1024, %s150, %s138, 256, 256, 16
        $region28: #{tpu_custom_call.1} parent=23 // pred_fallthru
          _
      $region24: #{tpu_custom_call.1} parent=5 // pred_fallthru
        _
      %p156 = scmp.le.s32.totalorder 1, %s15
      %p157 = scmp.lt.s32.totalorder %s15, 3
      %p158 = pnand %p156, %p157
      %p159 = pneg %p158
      // Predicated region
      $region29: #{tpu_custom_call.1} parent=5 // pred_check
        _
      $region30: #{tpu_custom_call.1} parent=5 // pred_check_branch
        %161 = sbr.rel (%p158) target = $region32
      $region31: #{tpu_custom_call.1} parent=5 // pred_region
        %s162 = ssub.s32 %s15, 1
        %s163 = sand.u32 %s28, 1
        %s164 = scalar_lea.sflag [#allocation3], %s163
        %s165 = sand.u32 %s28, 1
        %s166 = smul.addr %s165, 64
        %s167 = scalar_lea.vmem [#allocation2], %s166
        // Predicated region
        $region33: #{tpu_custom_call.1} parent=31 // pred_check
          %p168 = pneg %p41
        $region34: #{tpu_custom_call.1} parent=31 // pred_check_branch
          %170 = sbr.rel (%p168) target = $region36
        $region35: #{tpu_custom_call.1} parent=31 // pred_region
          %172 = dma.done %s164, 1024
        $region36: #{tpu_custom_call.1} parent=31 // pred_fallthru
          _
        %s173 = sand.u32 %s28, 1
        %s174 = scalar_lea.sflag [#allocation3], %s173
        %s175 = sand.u32 %s28, 1
        %s176 = smul.addr %s175, 64
        %s177 = scalar_lea.vmem [#allocation2], %s176
        %p178 = pneg %p41
        %p179 = pneg %p38
        %p180 = pneg %p62
        %p181 = pneg %p59
        %p182 = pneg %p83
        %p183 = pneg %p80
        %p184 = pneg %p109
        %p185 = pneg %p106
        %s186 = sand.u32 %s96, 1
        %s187 = scalar_lea.sflag [#allocation4], %s186
        %s188 = sand.u32 %s96, 1
        %s189 = smul.addr %s188, 64
        %s190 = scalar_lea.vmem [#allocation5], %s189
        %v191 = vld [vmem:[%s167] sm:$0xff]
        %v192 = vld [vmem:[%s167 + $0x8] sm:$0xff]
        %v193 = vld [vmem:[%s167 + $0x10] sm:$0xff]
        %v194 = vld [vmem:[%s167 + $0x18] sm:$0xff]
        %v195 = vld [vmem:[%s167 + $0x20] sm:$0xff]
        %v196 = vld [vmem:[%s167 + $0x28] sm:$0xff]
        %v197 = vld [vmem:[%s167 + $0x30] sm:$0xff]
        %v198 = vld [vmem:[%s167 + $0x38] sm:$0xff]
        %v199 = vadd.f32 %v191, %v192
        %200 = vadd.xlane.f32.xlu0 %v199
        %v201 = vpop.xlane.xlu0 %200
        %v202 = vadd.f32 %v193, %v194
        %203 = vadd.xlane.f32.xlu0 %v202
        %v204 = vpop.xlane.xlu0 %203
        %v205 = vadd.f32 %v195, %v196
        %206 = vadd.xlane.f32.xlu0 %v205
        %v207 = vpop.xlane.xlu0 %206
        %v208 = vadd.f32 %v197, %v198
        %209 = vadd.xlane.f32.xlu0 %v208
        %v210 = vpop.xlane.xlu0 %209
        %v211 = vmul.f32 %v201, 0.00390625
        %v212 = vmul.f32 %v204, 0.00390625
        %v213 = vmul.f32 %v207, 0.00390625
        %v214 = vmul.f32 %v210, 0.00390625
        %v215 = vmax.f32 %v191, %v192
        %216 = vmax.xlane.f32.xlu0 %v215
        %v217 = vpop.xlane.xlu0 %216
        %v218 = vmax.f32 %v193, %v194
        %219 = vmax.xlane.f32.xlu0 %v218
        %v220 = vpop.xlane.xlu0 %219
        %v221 = vmax.f32 %v195, %v196
        %222 = vmax.xlane.f32.xlu0 %v221
        %v223 = vpop.xlane.xlu0 %222
        %v224 = vmax.f32 %v197, %v198
        %225 = vmax.xlane.f32.xlu0 %v224
        %v226 = vpop.xlane.xlu0 %225
        %vm227 = vcmask 7168
        %v228 = vsel %vm227, %v211, %v217
        %v229 = vsel %vm227, %v212, %v220
        %v230 = vsel %vm227, %v213, %v223
        %v231 = vsel %vm227, %v214, %v226
        %v232 = vld [vmem:[%s1] sm:$0x3]
        %vm233 = vcmask 261120
        %v235 = vsel %vm233, %v232, 0
        %237 = vmatpush.msra.mxu0 0.0
        %238 = vmatpush.msra.mxu0 0.0
        %239 = vmatpush.msra.mxu0 0.0
        %240 = vmatpush.msra.mxu0 0.0
        %241 = vmatpush.msra.mxu0 0.0
        %242 = vmatpush.msra.mxu0 0.0
        %243 = vmatpush.msra.mxu0 0.0
        %244 = vmatpush.msra.mxu0 0.0
        %245 = vmatpush.msra.mxu0 0.0
        %246 = vmatpush.msra.mxu0 0.0
        %247 = vmatpush.msra.mxu0 0.0
        %248 = vmatpush.msra.mxu0 0.0
        %249 = vmatpush.msra.mxu0 %v231
        %250 = vmatpush.msra.mxu0 %v230
        %251 = vmatpush.msra.mxu0 %v229
        %252 = vmatpush.msra.mxu0 %v228
        %253 = vmatmul.f32.gmra.mxu0 %v235
        %v254 = vpop.f32.mrf.mxu0
        %v255 = vadd.f32 0.0, %v254
        %256 = vdwg.mxu0
        %v257 = vmax.f32 %v255, 0.0
        %v258 = vld [vmem:[%s2] sm:$0xff]
        %v259 = vld [vmem:[%s2 + $0x8] sm:$0xff]
        %v260 = vld [vmem:[%s2 + $0x10] sm:$0xff]
        %v261 = vld [vmem:[%s2 + $0x18] sm:$0xff]
        %vm262 = vcmask 15360
        %v264 = vsel %vm262, %v258, 0
        %v267 = vsel %vm262, %v259, 0
        %v270 = vsel %vm262, %v260, 0
        %v273 = vsel %vm262, %v261, 0
        %vm275 = vcmask 1041408
        %v277 = vsel %vm275, %v257, 0
        %279 = vmatpush.msra.mxu0 0.0
        %280 = vmatpush.msra.mxu0 0.0
        %281 = vmatpush.msra.mxu0 0.0
        %282 = vmatpush.msra.mxu0 0.0
        %283 = vmatpush.msra.mxu0 0.0
        %284 = vmatpush.msra.mxu0 0.0
        %285 = vmatpush.msra.mxu0 0.0
        %286 = vmatpush.msra.mxu0 0.0
        %287 = vmatpush.msra.mxu0 0.0
        %288 = vmatpush.msra.mxu0 0.0
        %289 = vmatpush.msra.mxu0 0.0
        %290 = vmatpush.msra.mxu0 0.0
        %291 = vmatpush.msra.mxu0 0.0
        %292 = vmatpush.msra.mxu0 0.0
        %293 = vmatpush.msra.mxu0 0.0
        %294 = vmatpush.msra.mxu0 %v277
        %295 = vmatmul.f32.gmra.mxu0 %v264
        %v296 = vpop.f32.mrf.mxu0
        %v297 = vadd.f32 0.0, %v296
        %298 = vmatmul.f32.gmra.mxu0 %v267
        %v299 = vpop.f32.mrf.mxu0
        %v300 = vadd.f32 0.0, %v299
        %301 = vmatmul.f32.gmra.mxu0 %v270
        %v302 = vpop.f32.mrf.mxu0
        %v303 = vadd.f32 0.0, %v302
        %304 = vmatmul.f32.gmra.mxu0 %v273
        %v305 = vpop.f32.mrf.mxu0
        %v306 = vadd.f32 0.0, %v305
        %307 = vdwg.mxu0
        %312 = vrot.lane.b32.xlu0 %v297, 127
        %v313 = vpop.permute.xlu0 %312
        %314 = vrot.lane.b32.xlu0 %v300, 127
        %v315 = vpop.permute.xlu0 %314
        %316 = vrot.lane.b32.xlu0 %v303, 127
        %v317 = vpop.permute.xlu0 %316
        %318 = vrot.lane.b32.xlu0 %v306, 127
        %v319 = vpop.permute.xlu0 %318
        %v324 = vadd.f32 %v297, %v313
        %v325 = vadd.f32 %v300, %v315
        %v326 = vadd.f32 %v303, %v317
        %v327 = vadd.f32 %v306, %v319
        %v328 = vxor.u32 %v324, 2147483648
        %v329 = vxor.u32 %v325, 2147483648
        %v330 = vxor.u32 %v326, 2147483648
        %v331 = vxor.u32 %v327, 2147483648
        %v332 = vmul.f32 %v328, 1.442695
        %v333 = vpow.pop %v332
        %v334 = vmul.f32 %v329, 1.442695
        %v335 = vpow.pop %v334
        %v336 = vmul.f32 %v330, 1.442695
        %v337 = vpow.pop %v336
        %v338 = vmul.f32 %v331, 1.442695
        %v339 = vpow.pop %v338
        %v340 = vadd.f32 %v333, 1.0
        %v341 = vadd.f32 %v335, 1.0
        %v342 = vadd.f32 %v337, 1.0
        %v343 = vadd.f32 %v339, 1.0
        %v344 = vrcp.pop %v340
        %v345 = vmul.f32 %v340, %v344
        %v346 = vsub.f32 1.0, %v345
        %v347 = vmul.f32 %v344, %v346
        %v348 = vadd.f32 %v344, %v347
        %vm349 = vweird.f32 %v340
        %vm350 = vweird.f32 %v344
        %vm351 = vmor %vm349, %vm350
        %v352 = vsel %vm351, %v344, %v348
        %v353 = vand.u32 2147483647, %v340
        %vm354 = vcmp.eq.f32.partialorder %v353, 8.507059e+37
        %v355 = vand.u32 %v340, 2147483648
        %v356 = vor.u32 1.1754944e-38, %v355
        %v357 = vsel %vm354, %v356, %v352
        %v358 = vmul.f32 1.0, %v357
        %v359 = vrcp.pop %v341
        %v360 = vmul.f32 %v341, %v359
        %v361 = vsub.f32 1.0, %v360
        %v362 = vmul.f32 %v359, %v361
        %v363 = vadd.f32 %v359, %v362
        %vm364 = vweird.f32 %v341
        %vm365 = vweird.f32 %v359
        %vm366 = vmor %vm364, %vm365
        %v367 = vsel %vm366, %v359, %v363
        %v368 = vand.u32 2147483647, %v341
        %vm369 = vcmp.eq.f32.partialorder %v368, 8.507059e+37
        %v370 = vand.u32 %v341, 2147483648
        %v371 = vor.u32 1.1754944e-38, %v370
        %v372 = vsel %vm369, %v371, %v367
        %v373 = vmul.f32 1.0, %v372
        %v374 = vrcp.pop %v342
        %v375 = vmul.f32 %v342, %v374
        %v376 = vsub.f32 1.0, %v375
        %v377 = vmul.f32 %v374, %v376
        %v378 = vadd.f32 %v374, %v377
        %vm379 = vweird.f32 %v342
        %vm380 = vweird.f32 %v374
        %vm381 = vmor %vm379, %vm380
        %v382 = vsel %vm381, %v374, %v378
        %v383 = vand.u32 2147483647, %v342
        %vm384 = vcmp.eq.f32.partialorder %v383, 8.507059e+37
        %v385 = vand.u32 %v342, 2147483648
        %v386 = vor.u32 1.1754944e-38, %v385
        %v387 = vsel %vm384, %v386, %v382
        %v388 = vmul.f32 1.0, %v387
        %v389 = vrcp.pop %v343
        %v390 = vmul.f32 %v343, %v389
        %v391 = vsub.f32 1.0, %v390
        %v392 = vmul.f32 %v389, %v391
        %v393 = vadd.f32 %v389, %v392
        %vm394 = vweird.f32 %v343
        %vm395 = vweird.f32 %v389
        %vm396 = vmor %vm394, %vm395
        %v397 = vsel %vm396, %v389, %v393
        %v398 = vand.u32 2147483647, %v343
        %vm399 = vcmp.eq.f32.partialorder %v398, 8.507059e+37
        %v400 = vand.u32 %v343, 2147483648
        %v401 = vor.u32 1.1754944e-38, %v400
        %v402 = vsel %vm399, %v401, %v397
        %v403 = vmul.f32 1.0, %v402
        %405 = vset.pattern.permute.xlu0 0
        %406 = vperm.xlu0 %405, %v358
        %v407 = vpop.permute.xlu0 %406
        %410 = vset.pattern.permute.xlu0 0
        %411 = vperm.xlu0 %410, %v373
        %v412 = vpop.permute.xlu0 %411
        %415 = vset.pattern.permute.xlu0 0
        %416 = vperm.xlu0 %415, %v388
        %v417 = vpop.permute.xlu0 %416
        %420 = vset.pattern.permute.xlu0 0
        %421 = vperm.xlu0 %420, %v403
        %v422 = vpop.permute.xlu0 %421
        %v424 = vmul.f32 %v191, %v407
        %v425 = vmul.f32 %v192, %v407
        %v426 = vmul.f32 %v193, %v412
        %v427 = vmul.f32 %v194, %v412
        %v428 = vmul.f32 %v195, %v417
        %v429 = vmul.f32 %v196, %v417
        %v430 = vmul.f32 %v197, %v422
        %v431 = vmul.f32 %v198, %v422
        %432 = vst [vmem:[%s190] sm:$0xff] %v424
        %433 = vst [vmem:[%s190 + $0x8] sm:$0xff] %v425
        %434 = vst [vmem:[%s190 + $0x10] sm:$0xff] %v426
        %435 = vst [vmem:[%s190 + $0x18] sm:$0xff] %v427
        %436 = vst [vmem:[%s190 + $0x20] sm:$0xff] %v428
        %437 = vst [vmem:[%s190 + $0x28] sm:$0xff] %v429
        %438 = vst [vmem:[%s190 + $0x30] sm:$0xff] %v430
        %439 = vst [vmem:[%s190 + $0x38] sm:$0xff] %v431
        %s440 = sand.u32 %s96, 1
        %s441 = scalar_lea.sflag [#allocation4], %s440
        %s442 = sand.u32 %s96, 1
        %s443 = smul.addr %s442, 64
        %s444 = scalar_lea.vmem [#allocation5], %s443
        // Predicated region
        $region37: #{tpu_custom_call.1} parent=31 // pred_check
          %p445 = pneg %p106
        $region38: #{tpu_custom_call.1} parent=31 // pred_check_branch
          %447 = sbr.rel (%p445) target = $region40
        $region39: #{tpu_custom_call.1} parent=31 // pred_region
          %449 = vsyncadd %s441, 0
          %s450 = smul.addr %s20, 8
          %s451 = smul.addr %s450, 8
          %s452 = scalar_lea.hbm %s3, %s451
          %s453 = sshll.u32 %s444, 4
          %s454 = int_to_ptr.vmem [resolvable:$true] %s453
          %s455 = sshll.u32 %s452, 4
          %s456 = int_to_ptr.hbm [resolvable:$true] %s455
          %461 = dma.vmem_to_hbm [thread:$0]  %s454, 1024, %s456, %s441, 256, 256, 16
        $region40: #{tpu_custom_call.1} parent=31 // pred_fallthru
          _
      $region32: #{tpu_custom_call.1} parent=5 // pred_fallthru
        _
      %p462 = scmp.le.s32.totalorder 2, %s15
      // Predicated region
      $region41: #{tpu_custom_call.1} parent=5 // pred_check
        %p463 = pneg %p462
      $region42: #{tpu_custom_call.1} parent=5 // pred_check_branch
        %465 = sbr.rel (%p463) target = $region44
      $region43: #{tpu_custom_call.1} parent=5 // pred_region
        %s466 = ssub.s32 %s15, 2
        // Predicated region
        $region45: #{tpu_custom_call.1} parent=43 // pred_check
          %p467 = pneg %p112
        $region46: #{tpu_custom_call.1} parent=43 // pred_check_branch
          %469 = sbr.rel (%p467) target = $region48
        $region47: #{tpu_custom_call.1} parent=43 // pred_region
          %s470 = sand.u32 %s97, 1
          %s471 = scalar_lea.sflag [#allocation4], %s470
          %s472 = sand.u32 %s97, 1
          %s473 = smul.addr %s472, 64
          %s474 = scalar_lea.vmem [#allocation5], %s473
          %476 = dma.done %s471, 1024
        $region48: #{tpu_custom_call.1} parent=43 // pred_fallthru
          _
      $region44: #{tpu_custom_call.1} parent=5 // pred_fallthru
        _
    $region6: #{tpu_custom_call.1} parent=1 // loop_footer
      %s19 = sadd.s32 1, %s15
    $region7: #{tpu_custom_call.1} parent=1 // loop_footer_branch
      %14 = sbr.rel target = $region3
    $region8: #{tpu_custom_call.1} parent=1 // loop_exit
      _
    %477 = vsyncpa [#allocation3], 1
    %s478 = scalar_lea.sflag [#allocation3], 1
    %479 = vsyncpa %s478, 1
    %480 = vsyncpa [#allocation4], 1
    %s481 = scalar_lea.sflag [#allocation4], 1
    %482 = vsyncpa %s481, 1

</llo_original>
